<compile_context>
chip_gen: v6e
topology: v6e:2x2x1
jax: 0.10.0
libtpu: 0.0.40
codegen_flags: <defaults>
</compile_context>

<pallas_src>
import functools

import jax
import jax.numpy as jnp
from jax import lax
from jax.experimental import pallas as pl
from jax.experimental.pallas import tpu as pltpu

_LANES = 128
_SUBLANES = 8


def _round_up(x, m):
    return (x + m - 1) // m * m


def _device_info():
    """Best-effort (tensorcores_per_device, device_kind)."""
    try:
        kind = jax.devices()[0].device_kind.lower()
    except Exception:
        return 1, ""
    n_tc = 2 if ("v7" in kind or "v4" in kind) else 1
    return n_tc, kind


def _soft_inv_dice_kernel(lg_ref, tg_ref, inter_out_ref, denom_out_ref, *,
                          total_rows, block_rows, blocks_per_split):
    c = pl.program_id(0)   # core split ("parallel")
    j = pl.program_id(1)   # chunk within split ("arbitrary")

    @pl.when(j == 0)
    def _init():
        inter_out_ref[...] = jnp.zeros((_SUBLANES, _LANES), jnp.float32)
        denom_out_ref[...] = jnp.zeros((_SUBLANES, _LANES), jnp.float32)

    # Up-cast in-kernel; HBM traffic stays at the input dtype's width.
    logits = lg_ref[...].astype(jnp.float32)
    targets = tg_ref[...].astype(jnp.float32)

    # 1 - sigmoid(x) == sigmoid(-x): folds the subtract into the EUP input.
    iflat = jax.nn.sigmoid(-logits)
    tflat = 1.0 - targets
    prod = iflat * tflat
    sums = iflat + tflat          # fused iflat.sum() + tflat.sum()

    # Fold the (block_rows, 128) tile onto vreg-shaped (8, 128) accumulators
    # with pure VPU adds (no per-step cross-lane XLU reduction).
    fold = (block_rows // _SUBLANES, _SUBLANES, _LANES)

    # UNclamped block index: the clamped duplicate block of an uneven split
    # gets row0 >= total_rows, so its mask is all-false -> contributes zero.
    block_idx = c * blocks_per_split + j
    row0 = block_idx * block_rows
    row_end = row0 + block_rows

    @pl.when(row_end <= total_rows)
    def _full_block():
        # Fast path for every fully in-bounds block: no iota / mask math.
        inter_out_ref[...] += jnp.sum(prod.reshape(fold), axis=0)
        denom_out_ref[...] += jnp.sum(sums.reshape(fold), axis=0)

    @pl.when(row_end > total_rows)
    def _tail_block():
        # Row-level mask only (no lane iota, no *128 multiply).  jnp.where
        # keeps any garbage (NaN/Inf) in the ragged region from leaking in.
        row_iota = lax.broadcasted_iota(jnp.int32, (block_rows, _LANES), 0)
        mask = (row0 + row_iota) < total_rows
        inter_out_ref[...] += jnp.sum(
            jnp.where(mask, prod, 0.0).reshape(fold), axis=0)
        denom_out_ref[...] += jnp.sum(
            jnp.where(mask, sums, 0.0).reshape(fold), axis=0)


@functools.partial(jax.jit, static_argnames=("block_rows",))
def soft_inv_dice_loss(logits, targets, *, block_rows=None):
    """Pallas implementation of SoftInvDiceLoss.forward (returns f32 scalar)."""
    n = logits.size
    flat_l = logits.reshape(-1)
    flat_t = targets.reshape(-1)

    n_tc, kind = _device_info()
    if block_rows is None:
        # Bigger blocks on v7x (higher HBM BW -> per-step overhead dominates).
        block_rows = 8192 if "v7" in kind else 4096

    full_rows = n // _LANES
    rem = n - full_rows * _LANES

    # <=127 leftover elements: tiny XLA reduction in the wrapper instead of a
    # full jnp.pad copy of both inputs (keeps HBM traffic at one read each).
    if rem:
        tail_if = jax.nn.sigmoid(-flat_l[full_rows * _LANES:].astype(jnp.float32))
        tail_tf = 1.0 - flat_t[full_rows * _LANES:].astype(jnp.float32)
        inter = jnp.sum(tail_if * tail_tf)
        denom = jnp.sum(tail_if + tail_tf)
    else:
        inter = jnp.float32(0.0)
        denom = jnp.float32(0.0)

    if full_rows > 0:
        l2 = flat_l[: full_rows * _LANES].reshape(full_rows, _LANES)
        t2 = flat_t[: full_rows * _LANES].reshape(full_rows, _LANES)

        # Tile sizing: big blocks for streaming efficiency, clamped (and
        # rounded to the native sublane tile) so tiny inputs stay one block.
        min_sub = 16 if (l2.dtype.itemsize < 4 or t2.dtype.itemsize < 4) else _SUBLANES
        block_rows_eff = max(min_sub, min(block_rows, _round_up(full_rows, min_sub)))

        total_blocks = pl.cdiv(full_rows, block_rows_eff)
        # Split two ways only on chips that actually have 2 TensorCores.
        num_splits = n_tc if total_blocks >= n_tc else 1
        blocks_per_split = pl.cdiv(total_blocks, num_splits)

        def in_map(c, j):
            # Clamp so the DMA start is always in-bounds; the duplicated block
            # of an uneven split contributes zero via the in-kernel mask.
            return (jnp.minimum(c * blocks_per_split + j, total_blocks - 1), 0)

        kernel = functools.partial(
            _soft_inv_dice_kernel,
            total_rows=full_rows,
            block_rows=block_rows_eff,
            blocks_per_split=blocks_per_split,
        )

        inter_p, denom_p = pl.pallas_call(
            kernel,
            out_shape=(
                jax.ShapeDtypeStruct((num_splits, _SUBLANES, _LANES), jnp.float32),
                jax.ShapeDtypeStruct((num_splits, _SUBLANES, _LANES), jnp.float32),
            ),
            grid_spec=pltpu.PrefetchScalarGridSpec(
                num_scalar_prefetch=0,
                grid=(num_splits, blocks_per_split),
                in_specs=[
                    pl.BlockSpec((block_rows_eff, _LANES), in_map),
                    pl.BlockSpec((block_rows_eff, _LANES), in_map),
                ],
                out_specs=[
                    pl.BlockSpec((None, _SUBLANES, _LANES), lambda c, j: (c, 0, 0)),
                    pl.BlockSpec((None, _SUBLANES, _LANES), lambda c, j: (c, 0, 0)),
                ],
            ),
            compiler_params=pltpu.CompilerParams(
                dimension_semantics=("parallel", "arbitrary")),
        )(l2, t2)

        inter = inter + jnp.sum(inter_p)
        denom = denom + jnp.sum(denom_p)

    smooth = jnp.float32(1.0)
    return 1.0 - (2.0 * inter + smooth) / (denom + smooth)


def _reference(logits, targets):
    smooth = 1.0
    p = jax.nn.sigmoid(logits.astype(jnp.float32)).reshape(-1)
    iflat = 1.0 - p
    tflat = 1.0 - targets.astype(jnp.float32).reshape(-1)
    inter = jnp.sum(iflat * tflat)
    return 1.0 - (2.0 * inter + smooth) / (jnp.sum(iflat) + jnp.sum(tflat) + smooth)


if __name__ == "__main__":
    key = jax.random.PRNGKey(0)
    k1, k2, k3, k4 = jax.random.split(key, 4)

    # Shapes consistent with a segmentation logits/targets pair (NCHW).
    logits = jax.random.normal(k1, (2, 4, 16, 16), dtype=jnp.float32)
    targets = jax.random.bernoulli(k2, 0.5, (2, 4, 16, 16)).astype(jnp.float32)
    loss = soft_inv_dice_loss(logits, targets)
    jax.block_until_ready(loss)
    ref = _reference(logits, targets)
    assert jnp.allclose(loss, ref, atol=1e-5, rtol=1e-5), (loss, ref)

    # Non-lane-aligned element count: exercises the wrapper remainder path.
    logits2 = jax.random.normal(k3, (5, 5, 5, 17), dtype=jnp.float32)
    targets2 = jax.random.bernoulli(k4, 0.5, (5, 5, 5, 17)).astype(jnp.float32)
    loss2 = soft_inv_dice_loss(logits2, targets2)
    jax.block_until_ready(loss2)
    ref2 = _reference(logits2, targets2)
    assert jnp.allclose(loss2, ref2, atol=1e-5, rtol=1e-5), (loss2, ref2)

    print("KERNEL_OK")
</pallas_src>

<mosaic_0001>
module attributes {stable_mosaic.version = 11 : i64} {
  func.func @_soft_inv_dice_kernel(%arg0: i32, %arg1: i32, %arg2: memref<16x128xf32, #tpu.memory_space<vmem>>, %arg3: memref<16x128xf32, #tpu.memory_space<vmem>>, %arg4: memref<1x8x128xf32, #tpu.memory_space<vmem>>, %arg5: memref<1x8x128xf32, #tpu.memory_space<vmem>>) attributes {dimension_semantics = [#tpu.dimension_semantics<parallel>, #tpu.dimension_semantics<arbitrary>], iteration_bounds = array<i64: 1, 1>, scalar_prefetch = 0 : i64, scratch_operands = 0 : i64, tpu.core_type = #tpu.core_type<tc>, window_params = [{transform_indices = @transform_0, window_bounds = array<i64: 16, 128>}, {transform_indices = @transform_1, window_bounds = array<i64: 16, 128>}, {transform_indices = @transform_2, window_bounds = array<i64: 1, 8, 128>}, {transform_indices = @transform_3, window_bounds = array<i64: 1, 8, 128>}]} {
    %c0_i32 = arith.constant 0 : i32
    %0 = arith.cmpi eq, %arg1, %c0_i32 : i32
    %1 = arith.extui %0 : i1 to i32
    %c0_i32_0 = arith.constant 0 : i32
    %2 = arith.cmpi ne, %1, %c0_i32_0 : i32
    scf.if %2 {
      %cst_11 = arith.constant 0.000000e+00 : f32
      %26 = vector.broadcast %cst_11 : f32 to vector<8x128xf32>
      %c0_12 = arith.constant 0 : index
      %c0_13 = arith.constant 0 : index
      %c0_14 = arith.constant 0 : index
      %27 = vector.load %arg4[%c0_12, %c0_13, %c0_14] : memref<1x8x128xf32, #tpu.memory_space<vmem>>, vector<1x8x128xf32>
      %28 = vector.shape_cast %27 : vector<1x8x128xf32> to vector<8x128xf32>
      %29 = vector.shape_cast %26 : vector<8x128xf32> to vector<1x8x128xf32>
      tpu.vector_store %arg4[%c0_12, %c0_13, %c0_14], %29 {strides = array<i32>} : memref<1x8x128xf32, #tpu.memory_space<vmem>>, vector<1x8x128xf32>,
      %cst_15 = arith.constant 0.000000e+00 : f32
      %30 = vector.broadcast %cst_15 : f32 to vector<8x128xf32>
      %c0_16 = arith.constant 0 : index
      %c0_17 = arith.constant 0 : index
      %c0_18 = arith.constant 0 : index
      %31 = vector.load %arg5[%c0_16, %c0_17, %c0_18] : memref<1x8x128xf32, #tpu.memory_space<vmem>>, vector<1x8x128xf32>
      %32 = vector.shape_cast %31 : vector<1x8x128xf32> to vector<8x128xf32>
      %33 = vector.shape_cast %30 : vector<8x128xf32> to vector<1x8x128xf32>
      tpu.vector_store %arg5[%c0_16, %c0_17, %c0_18], %33 {strides = array<i32>} : memref<1x8x128xf32, #tpu.memory_space<vmem>>, vector<1x8x128xf32>,
    } else {
    }
    %c0 = arith.constant 0 : index
    %c0_1 = arith.constant 0 : index
    %3 = vector.load %arg2[%c0, %c0_1] : memref<16x128xf32, #tpu.memory_space<vmem>>, vector<16x128xf32>
    %c0_2 = arith.constant 0 : index
    %c0_3 = arith.constant 0 : index
    %4 = vector.load %arg3[%c0_2, %c0_3] : memref<16x128xf32, #tpu.memory_space<vmem>>, vector<16x128xf32>
    %cst = arith.constant 0.000000e+00 : f32
    %5 = vector.broadcast %cst : f32 to vector<16x128xf32>
    %6 = arith.subf %5, %3 : vector<16x128xf32>
    %7 = arith.negf %6 : vector<16x128xf32>
    %8 = math.exp %7 : vector<16x128xf32>
    %cst_4 = arith.constant 1.000000e+00 : f32
    %9 = vector.broadcast %cst_4 : f32 to vector<16x128xf32>
    %10 = arith.addf %9, %8 : vector<16x128xf32>
    %11 = arith.divf %9, %10 : vector<16x128xf32>
    %cst_5 = arith.constant 1.000000e+00 : f32
    %12 = vector.broadcast %cst_5 : f32 to vector<16x128xf32>
    %13 = arith.subf %12, %4 : vector<16x128xf32>
    %14 = arith.mulf %11, %13 : vector<16x128xf32>
    %15 = arith.addf %11, %13 : vector<16x128xf32>
    %c1_i32 = arith.constant 1 : i32
    %16 = arith.muli %arg0, %c1_i32 : i32
    %17 = arith.addi %16, %arg1 : i32
    %c16_i32 = arith.constant 16 : i32
    %18 = arith.muli %17, %c16_i32 : i32
    %c16_i32_6 = arith.constant 16 : i32
    %19 = arith.addi %18, %c16_i32_6 : i32
    %c16_i32_7 = arith.constant 16 : i32
    %20 = arith.cmpi sle, %19, %c16_i32_7 : i32
    %21 = arith.extui %20 : i1 to i32
    %c0_i32_8 = arith.constant 0 : i32
    %22 = arith.cmpi ne, %21, %c0_i32_8 : i32
    scf.if %22 {
      %c0_11 = arith.constant 0 : index
      %c0_12 = arith.constant 0 : index
      %c0_13 = arith.constant 0 : index
      %26 = vector.load %arg4[%c0_11, %c0_12, %c0_13] : memref<1x8x128xf32, #tpu.memory_space<vmem>>, vector<1x8x128xf32>
      %27 = vector.shape_cast %26 : vector<1x8x128xf32> to vector<8x128xf32>
      %28 = vector.shape_cast %14 : vector<16x128xf32> to vector<2x8x128xf32>
      %cst_14 = arith.constant dense<0.000000e+00> : vector<8x128xf32>
      %29 = vector.multi_reduction <add>, %28, %cst_14 [0] : vector<2x8x128xf32> to vector<8x128xf32>
      %30 = arith.addf %27, %29 : vector<8x128xf32>
      %c0_15 = arith.constant 0 : index
      %c0_16 = arith.constant 0 : index
      %c0_17 = arith.constant 0 : index
      %31 = vector.load %arg4[%c0_15, %c0_16, %c0_17] : memref<1x8x128xf32, #tpu.memory_space<vmem>>, vector<1x8x128xf32>
      %32 = vector.shape_cast %31 : vector<1x8x128xf32> to vector<8x128xf32>
      %33 = vector.shape_cast %30 : vector<8x128xf32> to vector<1x8x128xf32>
      tpu.vector_store %arg4[%c0_15, %c0_16, %c0_17], %33 {strides = array<i32>} : memref<1x8x128xf32, #tpu.memory_space<vmem>>, vector<1x8x128xf32>,
      %c0_18 = arith.constant 0 : index
      %c0_19 = arith.constant 0 : index
      %c0_20 = arith.constant 0 : index
      %34 = vector.load %arg5[%c0_18, %c0_19, %c0_20] : memref<1x8x128xf32, #tpu.memory_space<vmem>>, vector<1x8x128xf32>
      %35 = vector.shape_cast %34 : vector<1x8x128xf32> to vector<8x128xf32>
      %36 = vector.shape_cast %15 : vector<16x128xf32> to vector<2x8x128xf32>
      %cst_21 = arith.constant dense<0.000000e+00> : vector<8x128xf32>
      %37 = vector.multi_reduction <add>, %36, %cst_21 [0] : vector<2x8x128xf32> to vector<8x128xf32>
      %38 = arith.addf %35, %37 : vector<8x128xf32>
      %c0_22 = arith.constant 0 : index
      %c0_23 = arith.constant 0 : index
      %c0_24 = arith.constant 0 : index
      %39 = vector.load %arg5[%c0_22, %c0_23, %c0_24] : memref<1x8x128xf32, #tpu.memory_space<vmem>>, vector<1x8x128xf32>
      %40 = vector.shape_cast %39 : vector<1x8x128xf32> to vector<8x128xf32>
      %41 = vector.shape_cast %38 : vector<8x128xf32> to vector<1x8x128xf32>
      tpu.vector_store %arg5[%c0_22, %c0_23, %c0_24], %41 {strides = array<i32>} : memref<1x8x128xf32, #tpu.memory_space<vmem>>, vector<1x8x128xf32>,
    } else {
    }
    %c16_i32_9 = arith.constant 16 : i32
    %23 = arith.cmpi sgt, %19, %c16_i32_9 : i32
    %24 = arith.extui %23 : i1 to i32
    %c0_i32_10 = arith.constant 0 : i32
    %25 = arith.cmpi ne, %24, %c0_i32_10 : i32
    scf.if %25 {
      %26 = tpu.iota {dimensions = array<i32: 0>} : vector<16x128xi32>
      %27 = vector.broadcast %18 : i32 to vector<16x128xi32>
      %28 = arith.addi %27, %26 : vector<16x128xi32>
      %c16_i32_11 = arith.constant 16 : i32
      %29 = vector.broadcast %c16_i32_11 : i32 to vector<16x128xi32>
      %30 = arith.cmpi slt, %28, %29 : vector<16x128xi32>
      %c0_12 = arith.constant 0 : index
      %c0_13 = arith.constant 0 : index
      %c0_14 = arith.constant 0 : index
      %31 = vector.load %arg4[%c0_12, %c0_13, %c0_14] : memref<1x8x128xf32, #tpu.memory_space<vmem>>, vector<1x8x128xf32>
      %32 = vector.shape_cast %31 : vector<1x8x128xf32> to vector<8x128xf32>
      %cst_15 = arith.constant 0.000000e+00 : f32
      %33 = vector.broadcast %cst_15 : f32 to vector<16x128xf32>
      %34 = arith.select %30, %14, %33 : vector<16x128xi1>, vector<16x128xf32>
      %35 = vector.shape_cast %34 : vector<16x128xf32> to vector<2x8x128xf32>
      %cst_16 = arith.constant dense<0.000000e+00> : vector<8x128xf32>
      %36 = vector.multi_reduction <add>, %35, %cst_16 [0] : vector<2x8x128xf32> to vector<8x128xf32>
      %37 = arith.addf %32, %36 : vector<8x128xf32>
      %c0_17 = arith.constant 0 : index
      %c0_18 = arith.constant 0 : index
      %c0_19 = arith.constant 0 : index
      %38 = vector.load %arg4[%c0_17, %c0_18, %c0_19] : memref<1x8x128xf32, #tpu.memory_space<vmem>>, vector<1x8x128xf32>
      %39 = vector.shape_cast %38 : vector<1x8x128xf32> to vector<8x128xf32>
      %40 = vector.shape_cast %37 : vector<8x128xf32> to vector<1x8x128xf32>
      tpu.vector_store %arg4[%c0_17, %c0_18, %c0_19], %40 {strides = array<i32>} : memref<1x8x128xf32, #tpu.memory_space<vmem>>, vector<1x8x128xf32>,
      %c0_20 = arith.constant 0 : index
      %c0_21 = arith.constant 0 : index
      %c0_22 = arith.constant 0 : index
      %41 = vector.load %arg5[%c0_20, %c0_21, %c0_22] : memref<1x8x128xf32, #tpu.memory_space<vmem>>, vector<1x8x128xf32>
      %42 = vector.shape_cast %41 : vector<1x8x128xf32> to vector<8x128xf32>
      %cst_23 = arith.constant 0.000000e+00 : f32
      %43 = vector.broadcast %cst_23 : f32 to vector<16x128xf32>
      %44 = arith.select %30, %15, %43 : vector<16x128xi1>, vector<16x128xf32>
      %45 = vector.shape_cast %44 : vector<16x128xf32> to vector<2x8x128xf32>
      %cst_24 = arith.constant dense<0.000000e+00> : vector<8x128xf32>
      %46 = vector.multi_reduction <add>, %45, %cst_24 [0] : vector<2x8x128xf32> to vector<8x128xf32>
      %47 = arith.addf %42, %46 : vector<8x128xf32>
      %c0_25 = arith.constant 0 : index
      %c0_26 = arith.constant 0 : index
      %c0_27 = arith.constant 0 : index
      %48 = vector.load %arg5[%c0_25, %c0_26, %c0_27] : memref<1x8x128xf32, #tpu.memory_space<vmem>>, vector<1x8x128xf32>
      %49 = vector.shape_cast %48 : vector<1x8x128xf32> to vector<8x128xf32>
      %50 = vector.shape_cast %47 : vector<8x128xf32> to vector<1x8x128xf32>
      tpu.vector_store %arg5[%c0_25, %c0_26, %c0_27], %50 {strides = array<i32>} : memref<1x8x128xf32, #tpu.memory_space<vmem>>, vector<1x8x128xf32>,
    } else {
    }
    return
  }
  func.func @transform_0(%arg0: i32, %arg1: i32) -> (i32, i32) {
    %c1_i32 = arith.constant 1 : i32
    %0 = arith.muli %arg0, %c1_i32 : i32
    %1 = arith.addi %0, %arg1 : i32
    %c0_i32 = arith.constant 0 : i32
    %2 = arith.minsi %1, %c0_i32 : i32
    %c0_i32_0 = arith.constant 0 : i32
    %c0_i32_1 = arith.constant 0 : i32
    return %2, %c0_i32_0 : i32, i32
  }
  func.func @transform_1(%arg0: i32, %arg1: i32) -> (i32, i32) {
    %c1_i32 = arith.constant 1 : i32
    %0 = arith.muli %arg0, %c1_i32 : i32
    %1 = arith.addi %0, %arg1 : i32
    %c0_i32 = arith.constant 0 : i32
    %2 = arith.minsi %1, %c0_i32 : i32
    %c0_i32_0 = arith.constant 0 : i32
    %c0_i32_1 = arith.constant 0 : i32
    return %2, %c0_i32_0 : i32, i32
  }
  func.func @transform_2(%arg0: i32, %arg1: i32) -> (i32, i32, i32) {
    %c0_i32 = arith.constant 0 : i32
    %c0_i32_0 = arith.constant 0 : i32
    %c0_i32_1 = arith.constant 0 : i32
    return %arg0, %c0_i32, %c0_i32_0 : i32, i32, i32
  }
  func.func @transform_3(%arg0: i32, %arg1: i32) -> (i32, i32, i32) {
    %c0_i32 = arith.constant 0 : i32
    %c0_i32_0 = arith.constant 0 : i32
    %c0_i32_1 = arith.constant 0 : i32
    return %arg0, %c0_i32, %c0_i32_0 : i32, i32, i32
  }
}

</mosaic_0001>

<llo_original>
// kernel: soft_inv_dice_loss.1
$region0: #{soft_inv_dice_loss.1}
  #allocation0 [shape = 'u32[]', space=smem, size = 0x4, offset = 0x4, fixed_abs, tag = 'smem constant byte address 0x4 - core index']
  #allocation1 [shape = 'u32[144,128]{1,0:T(1,128)}', space=vmem, size = 0x12000, scoped, tag = 'internal scratch']
  %s0 = inlined_call_operand.vmem [shape: f32[16,128], index: 0, kind: input, shape index: {}]
  %s1 = inlined_call_operand.vmem [shape: f32[16,128], index: 1, kind: input, shape index: {}]
  %s2 = inlined_call_operand.vmem [shape: f32[1,8,128], index: 2, kind: output, shape index: {0}]
  %s3 = inlined_call_operand.vmem [shape: f32[1,8,128], index: 3, kind: output, shape index: {1}]
  %4 = xla_tuple %s2, %s3
  %s5 = sld [smem:[#allocation0]]
  $region38: #{soft_inv_dice_loss.1} parent=0
    _
  %s7 = ssub.s32 1, %s5
  %s8 = scalar_select 0, %s7, %s5
  // Predicated region
  $region2: #{soft_inv_dice_loss.1} parent=0 // pred_check
    _
  $region3: #{soft_inv_dice_loss.1} parent=0 // pred_check_branch
    %10 = sbr.rel (0) target = $region5
  $region4: #{soft_inv_dice_loss.1} parent=0 // pred_region
    %s11 = sadd.s32 0, 0
    %p12 = scmp.lt.s32.totalorder %s11, 0
    %s13 = scalar_select %p12, %s11, 0
    %s14 = smul.u32 2, %s13
    %p15 = scmp.lt.s32.totalorder %s14, 1
    %s16 = scalar_select %p15, %s14, 1
    %s17 = smul.addr %s16, 8
    %s18 = scalar_lea.vmem %s0, %s17
    %s19 = sadd.s32 0, 0
    %p20 = scmp.lt.s32.totalorder %s19, 0
    %s21 = scalar_select %p20, %s19, 0
    %s22 = smul.u32 2, %s21
  $region5: #{soft_inv_dice_loss.1} parent=0 // pred_fallthru
    _
  // Predicated region
  $region6: #{soft_inv_dice_loss.1} parent=0 // pred_check
    _
  $region7: #{soft_inv_dice_loss.1} parent=0 // pred_check_branch
    %24 = sbr.rel (0) target = $region9
  $region8: #{soft_inv_dice_loss.1} parent=0 // pred_region
    %s25 = sadd.s32 0, 0
    %p26 = scmp.lt.s32.totalorder %s25, 0
    %s27 = scalar_select %p26, %s25, 0
    %s28 = smul.u32 2, %s27
    %p29 = scmp.lt.s32.totalorder %s28, 1
    %s30 = scalar_select %p29, %s28, 1
    %s31 = smul.addr %s30, 8
    %s32 = scalar_lea.vmem %s1, %s31
    %s33 = sadd.s32 0, 0
    %p34 = scmp.lt.s32.totalorder %s33, 0
    %s35 = scalar_select %p34, %s33, 0
    %s36 = smul.u32 2, %s35
  $region9: #{soft_inv_dice_loss.1} parent=0 // pred_fallthru
    _
  %s37 = sadd.s32 0, 0
  %p38 = scmp.lt.s32.totalorder %s37, 0
  %s39 = scalar_select %p38, %s37, 0
  %s40 = smul.u32 2, %s39
  %p41 = scmp.lt.s32.totalorder %s40, 1
  %s42 = scalar_select %p41, %s40, 1
  %s43 = smul.addr %s42, 8
  %s44 = scalar_lea.vmem %s0, %s43
  %s45 = sadd.s32 0, 0
  %p46 = scmp.lt.s32.totalorder %s45, 0
  %s47 = scalar_select %p46, %s45, 0
  %s48 = smul.u32 2, %s47
  %p49 = scmp.lt.s32.totalorder %s48, 1
  %s50 = scalar_select %p49, %s48, 1
  %s51 = smul.addr %s50, 8
  %s52 = scalar_lea.vmem %s1, %s51
  %s53 = sadd.s32 0, 0
  %p54 = scmp.lt.s32.totalorder %s53, 0
  %s55 = scalar_select %p54, %s53, 0
  %s56 = smul.u32 2, %s55
  %p57 = scmp.lt.s32.totalorder %s56, 1
  %s58 = scalar_select %p57, %s56, 1
  %s59 = smul.addr %s58, 8
  %s60 = scalar_lea.vmem %s0, %s59
  %s61 = sadd.s32 0, 0
  %p62 = scmp.lt.s32.totalorder %s61, 0
  %s63 = scalar_select %p62, %s61, 0
  %s64 = smul.u32 2, %s63
  %s65 = sadd.s32 0, 0
  %p66 = scmp.lt.s32.totalorder %s65, 0
  %s67 = scalar_select %p66, %s65, 0
  %s68 = smul.u32 2, %s67
  %p69 = scmp.lt.s32.totalorder %s68, 1
  %s70 = scalar_select %p69, %s68, 1
  %s71 = smul.addr %s70, 8
  %s72 = scalar_lea.vmem %s1, %s71
  %s73 = sadd.s32 0, 0
  %p74 = scmp.lt.s32.totalorder %s73, 0
  %s75 = scalar_select %p74, %s73, 0
  %s76 = smul.u32 2, %s75
  %p77 = scmp.eq.s32.totalorder 0, 0
  // Predicated region
  $region10: #{soft_inv_dice_loss.1} parent=0 // pred_check
    %p78 = pneg %p77
  $region11: #{soft_inv_dice_loss.1} parent=0 // pred_check_branch
    %80 = sbr.rel (%p78) target = $region13
  $region12: #{soft_inv_dice_loss.1} parent=0 // pred_region
    %81 = vst [vmem:[%s2] sm:$0xff] 0.0
    %82 = vst [vmem:[%s3] sm:$0xff] 0.0
  $region13: #{soft_inv_dice_loss.1} parent=0 // pred_fallthru
    _
  %v83 = vld [vmem:[%s60] sm:$0xff]
  %v84 = vld [vmem:[%s60 + $0x8] sm:$0xff]
  %v85 = vld [vmem:[%s72] sm:$0xff]
  %v86 = vld [vmem:[%s72 + $0x8] sm:$0xff]
  %v87 = vsub.f32 0.0, %v83
  %v88 = vsub.f32 0.0, %v84
  %v89 = vxor.u32 %v87, 2147483648
  %v90 = vxor.u32 %v88, 2147483648
  %v91 = vmul.f32 %v89, 1.442695
  %v92 = vpow.pop %v91
  %v93 = vmul.f32 %v90, 1.442695
  %v94 = vpow.pop %v93
  %v95 = vadd.f32 %v92, 1.0
  %v96 = vadd.f32 %v94, 1.0
  %v97 = vrcp.pop %v95
  %v98 = vmul.f32 1.0, %v97
  %v99 = vrcp.pop %v96
  %v100 = vmul.f32 1.0, %v99
  %v101 = vsub.f32 1.0, %v85
  %v102 = vsub.f32 1.0, %v86
  %v103 = vmul.f32 %v98, %v101
  %v104 = vmul.f32 %v100, %v102
  %v105 = vadd.f32 %v98, %v101
  %v106 = vadd.f32 %v100, %v102
  %s107 = sadd.s32 0, 0
  %s108 = smul.u32 %s107, 16
  %s109 = sadd.s32 %s108, 16
  %p110 = scmp.le.s32.totalorder %s109, 16
  // Predicated region
  $region14: #{soft_inv_dice_loss.1} parent=0 // pred_check
    %p111 = pneg %p110
  $region15: #{soft_inv_dice_loss.1} parent=0 // pred_check_branch
    %113 = sbr.rel (%p111) target = $region17
  $region16: #{soft_inv_dice_loss.1} parent=0 // pred_region
    %v114 = vld [vmem:[%s2] sm:$0xff]
    %v115 = vadd.f32 %v103, %v104
    %v116 = vadd.f32 %v114, %v115
    %117 = vst [vmem:[%s2] sm:$0xff] %v116
    %v118 = vld [vmem:[%s3] sm:$0xff]
    %v119 = vadd.f32 %v105, %v106
    %v120 = vadd.f32 %v118, %v119
    %121 = vst [vmem:[%s3] sm:$0xff] %v120
  $region17: #{soft_inv_dice_loss.1} parent=0 // pred_fallthru
    _
  %p122 = scmp.gt.s32.totalorder %s109, 16
  // Predicated region
  $region18: #{soft_inv_dice_loss.1} parent=0 // pred_check
    %p123 = pneg %p122
  $region19: #{soft_inv_dice_loss.1} parent=0 // pred_check_branch
    %125 = sbr.rel (%p123) target = $region21
  $region20: #{soft_inv_dice_loss.1} parent=0 // pred_region
    %v126 = vlaneseq
    %v127 = vshrl.u32 %v126, 7
    %v128 = vadd.s32 %v127, 8
    %v129 = vstv %s108
    %v130 = vadd.s32 %v129, %v127
    %v131 = vadd.s32 %v129, %v128
    %vm132 = vcmp.lt.s32.totalorder %v130, 16
    %vm133 = vcmp.lt.s32.totalorder %v131, 16
    %v134 = vld [vmem:[%s2] sm:$0xff]
    %v135 = vsel %vm132, %v103, 0.0
    %v136 = vsel %vm133, %v104, 0.0
    %v137 = vadd.f32 %v135, %v136
    %v138 = vadd.f32 %v134, %v137
    %139 = vst [vmem:[%s2] sm:$0xff] %v138
    %v140 = vld [vmem:[%s3] sm:$0xff]
    %v141 = vsel %vm132, %v105, 0.0
    %v142 = vsel %vm133, %v106, 0.0
    %v143 = vadd.f32 %v141, %v142
    %v144 = vadd.f32 %v140, %v143
    %145 = vst [vmem:[%s3] sm:$0xff] %v144
  $region21: #{soft_inv_dice_loss.1} parent=0 // pred_fallthru
    _
  // Predicated region
  $region22: #{soft_inv_dice_loss.1} parent=0 // pred_check
    _
  $region23: #{soft_inv_dice_loss.1} parent=0 // pred_check_branch
    %147 = sbr.rel (0) target = $region25
  $region24: #{soft_inv_dice_loss.1} parent=0 // pred_region
    _
  $region25: #{soft_inv_dice_loss.1} parent=0 // pred_fallthru
    _
  // Predicated region
  $region26: #{soft_inv_dice_loss.1} parent=0 // pred_check
    _
  $region27: #{soft_inv_dice_loss.1} parent=0 // pred_check_branch
    %149 = sbr.rel (0) target = $region29
  $region28: #{soft_inv_dice_loss.1} parent=0 // pred_region
    _
  $region29: #{soft_inv_dice_loss.1} parent=0 // pred_fallthru
    _
  // Predicated region
  $region30: #{soft_inv_dice_loss.1} parent=0 // pred_check
    _
  $region31: #{soft_inv_dice_loss.1} parent=0 // pred_check_branch
    %151 = sbr.rel (0) target = $region33
  $region32: #{soft_inv_dice_loss.1} parent=0 // pred_region
    _
  $region33: #{soft_inv_dice_loss.1} parent=0 // pred_fallthru
    _
  // Predicated region
  $region34: #{soft_inv_dice_loss.1} parent=0 // pred_check
    _
  $region35: #{soft_inv_dice_loss.1} parent=0 // pred_check_branch
    %153 = sbr.rel (0) target = $region37
  $region36: #{soft_inv_dice_loss.1} parent=0 // pred_region
    _
  $region37: #{soft_inv_dice_loss.1} parent=0 // pred_fallthru
    _

</llo_original>
